<compile_context>
chip_gen: v7x
topology: tpu7x:2x2x1
jax: 0.10.0
libtpu: 0.0.40
codegen_flags: <defaults>
</compile_context>

<pallas_src>
import inspect
import math

import jax
import jax.numpy as jnp
import numpy as np
from jax import lax
from jax.experimental import pallas as pl
from jax.experimental.pallas import tpu as pltpu

LRELU_SLOPE = 0.1

# (in_ch, out_ch, kernel, stride, groups, padding) — the 7 convs of DiscriminatorS.
DISC_CONVS = [
    (1, 128, 15, 1, 1, 7),
    (128, 128, 41, 2, 4, 20),
    (128, 256, 41, 2, 16, 20),
    (256, 512, 41, 4, 16, 20),
    (512, 1024, 41, 4, 16, 20),
    (1024, 1024, 41, 1, 16, 20),
    (1024, 1024, 5, 1, 1, 2),
]
DISC_POST = (1024, 1, 3, 1, 1, 1)   # final Conv1d(1024 -> 1, k=3, p=1) — done in XLA.

_MIB = 1024 * 1024
_MAX_TT = 1024   # cap on the time tile (bounds in-kernel unrolling / compile time)


def _default_vmem_limit():
    # Generation-aware VMEM limit: ~75% of physical, capped at 100 MiB.
    # v5e/v6e (128 MiB) -> 96 MiB; v7x (64 MiB) -> 48 MiB.
    try:
        cap = int(pltpu.get_tpu_info().vmem_capacity_bytes)
    except Exception:
        cap = 64 * _MIB
    return int(min(100 * _MIB, (cap * 3) // 4))


_VMEM_LIMIT = _default_vmem_limit()


def _round_up(x, m):
    return ((x + m - 1) // m) * m


# --------------------------------------------------------------------------------------
# Buffered(1) capability probe (single-buffer the constant weight/bias blocks if the
# running Pallas supports it; otherwise fall back to default double buffering and the
# Tt budget below simply accounts for 2x weight buffers).
# --------------------------------------------------------------------------------------
_BUFFERED1_OK = None


def _buffered_one_supported():
    global _BUFFERED1_OK
    if _BUFFERED1_OK is not None:
        return _BUFFERED1_OK
    ok = False
    try:
        if hasattr(pl, "Buffered") and \
                "pipeline_mode" in inspect.signature(pl.BlockSpec).parameters:
            def k(x_ref, w_ref, o_ref):
                o_ref[...] = x_ref[...] + w_ref[...]

            x = jnp.arange(4 * 8 * 128, dtype=jnp.float32).reshape(4, 8, 128)
            w = 2.0 * jnp.arange(4 * 8 * 128, dtype=jnp.float32).reshape(4, 8, 128)
            out = pl.pallas_call(
                k,
                out_shape=jax.ShapeDtypeStruct((4, 8, 128), jnp.float32),
                grid=(4,),
                in_specs=[
                    pl.BlockSpec((None, 8, 128), lambda i: (i, 0, 0)),
                    pl.BlockSpec((None, 8, 128), lambda i: (i, 0, 0),
                                 pipeline_mode=pl.Buffered(1)),
                ],
                out_specs=pl.BlockSpec((None, 8, 128), lambda i: (i, 0, 0)),
            )(x, w)
            ok = bool(jnp.allclose(jax.block_until_ready(out), x + w))
    except Exception:
        ok = False
    _BUFFERED1_OK = ok
    return ok


# --------------------------------------------------------------------------------------
# Static layer geometry
# --------------------------------------------------------------------------------------
def _layer_meta(cin, cout, K, s, g, p):
    """Static per-layer configuration (tap/group packing geometry)."""
    cig = cin // g
    cog = cout // g
    special = (cin == 1)  # first conv: single input channel -> im2col in XLA (tiny data)
    if special:
        gblk, n_gb, D, cblk = 1, 1, 1, K
    else:
        # Smallest group block with exactly >= 128 output lanes.  Do NOT raise this to
        # 256: block-diagonal packing wastes (gblk-1)/gblk of the MACs, so wider packing
        # only doubles the waste (useful-FLOP ceiling is 1/gblk; worst case 1/8).
        gblk = min(g, -(-128 // cog))
        while g % gblk:
            gblk += 1
        n_gb = g // gblk
        D = -(-K // s)           # taps grouped by stride-phase offset (ceil(K/s))
        cblk = gblk * s * cig    # lane width of one tap-offset slab
    return dict(cin=cin, cout=cout, K=K, stride=s, groups=g, padding=p,
                cig=cig, cog=cog, gblk=gblk, n_gb=n_gb, D=D, cblk=cblk,
                nout=gblk * cog, special=special)


CONV_META = [_layer_meta(*cfg) for cfg in DISC_CONVS]


def _pack_weight(w_t, b_t, meta):
    """PyTorch Conv1d weight (C_out, C_in//G, K) + bias (C_out,) ->
       w: (n_gb, D*Cblk, Gblk*cog) bf16  (block-diagonal over groups inside a block;
                                          contraction index order: d, gi, r, ci)
       b: (n_gb, 1,      Gblk*cog) f32
    """
    G, K, s = meta["groups"], meta["K"], meta["stride"]
    cig, cog = meta["cig"], meta["cog"]
    gblk, n_gb, D = meta["gblk"], meta["n_gb"], meta["D"]
    if meta["special"]:
        wp = jnp.transpose(w_t[:, 0, :], (1, 0))[None]            # (1, K, C_out)
    else:
        K_pad = D * s
        w = w_t.reshape(G, cog, cig, K).transpose(0, 3, 2, 1)      # (G, K, cig, cog)
        w = jnp.pad(w, ((0, 0), (0, K_pad - K), (0, 0), (0, 0)))   # zero extra taps
        w = w.reshape(n_gb, gblk, D, s, cig, cog).transpose(0, 2, 1, 3, 4, 5)
        eye = jnp.eye(gblk, dtype=w.dtype)
        w = w[:, :, :, :, :, None, :] * eye[None, None, :, None, None, :, None]
        wp = w.reshape(n_gb, D * gblk * s * cig, gblk * cog)
    bp = b_t.reshape(n_gb, 1, gblk * cog).astype(jnp.float32)
    return wp.astype(jnp.bfloat16), bp


# --------------------------------------------------------------------------------------
# Pallas grouped Conv1d kernel
# --------------------------------------------------------------------------------------
def _make_conv_kernel(B, Tt, D, Cblk, Nout, MC, NC, apply_lrelu):
    # Pair taps when the per-tap contraction (Cblk) is < 256 so the MXU contraction
    # depth is filled on v6e/v7x; on v5e (128-deep MXU) this is neutral.
    TPD = 1
    if D > 1 and Cblk < 256:
        TPD = min(D, max(1, 256 // Cblk))

    def kernel(x_ref, w_ref, b_ref, o_ref):
        # x_ref: (B, Tq_blk, Cblk) bf16, w_ref: (D*Cblk, Nout) bf16,
        # b_ref: (1, Nout) f32,         o_ref: (B, Tt, Nout) bf16.
        # All slice offsets below are Python-static (fully unrolled loops).
        for n0 in range(0, Nout, NC):
            nc = min(NC, Nout - n0)
            bn = b_ref[:, pl.ds(n0, nc)]                      # (1, nc) f32 — hoisted
            for bi in range(B):
                for m0 in range(0, Tt, MC):
                    mc = min(MC, Tt - m0)
                    acc = None
                    for d0 in range(0, D, TPD):
                        dn = min(TPD, D - d0)
                        if dn == 1:
                            lhs = x_ref[bi, pl.ds(m0 + d0, mc), :]
                        else:
                            lhs = jnp.concatenate(
                                [x_ref[bi, pl.ds(m0 + d0 + j, mc), :]
                                 for j in range(dn)], axis=-1)
                        rhs = w_ref[pl.ds(d0 * Cblk, dn * Cblk), pl.ds(n0, nc)]
                        part = jnp.dot(lhs, rhs, preferred_element_type=jnp.float32)
                        acc = part if acc is None else acc + part
                    acc = acc + bn
                    if apply_lrelu:
                        acc = jnp.where(acc >= 0, acc, LRELU_SLOPE * acc)
                    o_ref[bi, pl.ds(m0, mc), pl.ds(n0, nc)] = acc.astype(o_ref.dtype)

    return kernel


def _pick_time_tile(meta, B, T_out, MC, w_bufs):
    """Largest time tile (multiple of MC, <=_MAX_TT) fitting the per-step VMEM budget."""
    D, Cblk, Nout, n_gb = meta["D"], meta["cblk"], meta["nout"], meta["n_gb"]
    ext = _round_up(D - 1, 16) if D > 1 else 0
    fixed = (w_bufs * D * Cblk * Nout * 2        # weight buffer(s), bf16
             + 2 * Nout * 4                      # bias
             + 4 * B * ext * Cblk)               # halo part of double-buffered input
    per_row = 4 * B * (Cblk + Nout)              # 2 bufs x bf16 x (input + output) / row
    budget = _VMEM_LIMIT - 8 * _MIB              # headroom for compiler scratch
    rows = (budget - fixed) // per_row
    Tt = max(MC, (rows // MC) * MC)
    Tt = min(Tt, _MAX_TT, _round_up(T_out, MC))
    if n_gb == 1 and T_out > MC:
        # Keep >= 2 time tiles so the second TensorCore is not idle (v7x megacore).
        Tt = min(Tt, _round_up(-(-T_out // 2), MC))
    return Tt


def grouped_conv1d(x, w_packed, b_packed, meta, *, apply_lrelu):
    """Grouped Conv1d (+ optional leaky-ReLU) as a Pallas TPU kernel.

    x: (B, T, C_in) bf16 channel-last.  Returns (B, T_out, C_out) bf16 with PyTorch
    Conv1d output-length semantics (rows beyond T_out computed from zero padding and
    sliced off).
    """
    x = x.astype(jnp.bfloat16)
    B, T, C_in = x.shape
    s, p, K, G = meta["stride"], meta["padding"], meta["K"], meta["groups"]
    cig, gblk, n_gb = meta["cig"], meta["gblk"], meta["n_gb"]
    D, Cblk, Nout, C_out = meta["D"], meta["cblk"], meta["nout"], meta["cout"]
    assert C_in == meta["cin"] == G * cig
    assert C_out == n_gb * Nout

    T_out = (T + 2 * p - K) // s + 1
    assert T_out >= 1

    MC = 256 if Nout <= 128 else 128   # keeps the f32 acc tile <= 32 vregs
    NC = min(128, Nout)

    use_buf1 = _buffered_one_supported()
    Tt = _pick_time_tile(meta, B, T_out, MC, w_bufs=1 if use_buf1 else 2)
    n_t = -(-T_out // Tt)
    T_out_pad = n_t * Tt
    halo = D - 1
    ext = _round_up(halo, 16) if halo else 0   # sublane-aligned halo
    Tq_blk = Tt + ext

    # --- XLA glue: pad, stride-phase decompose, group-block, and pre-tile (with halo).
    if meta["special"]:
        # C_in == 1: expand the K taps directly (im2col in XLA; data is tiny).
        total = (T_out_pad - 1) * s + K
        xp = jnp.pad(x[:, :, 0], ((0, 0), (p, max(0, total - T - p))))[:, :total]
        tidx = ((jnp.arange(n_t)[:, None, None] * Tt
                 + jnp.arange(Tt)[None, :, None]) * s
                + jnp.arange(K)[None, None, :])               # (n_t, Tt, K)
        xg = jnp.take(xp, tidx, axis=1)                        # (B, n_t, Tt, K)
        xg = jnp.transpose(xg, (1, 0, 2, 3))[None]             # (1, n_t, B, Tt, K)
    else:
        Tq_total = T_out_pad + ext
        total = Tq_total * s
        xp = jnp.pad(x, ((0, 0), (p, max(0, total - T - p)), (0, 0)))[:, :total, :]
        xp = xp.reshape(B, Tq_total, s, n_gb, gblk, cig)
        xp = jnp.transpose(xp, (3, 0, 1, 4, 2, 5))             # (n_gb, B, Tq, gblk, s, cig)
        tidx = jnp.arange(n_t)[:, None] * Tt + jnp.arange(Tq_blk)[None, :]
        xg = jnp.take(xp, tidx, axis=2)                        # (n_gb, B, n_t, Tq_blk, ...)
        xg = jnp.transpose(xg, (0, 2, 1, 3, 4, 5, 6))
        xg = xg.reshape(n_gb, n_t, B, Tq_blk, Cblk)

    kernel = _make_conv_kernel(B, Tt, D, Cblk, Nout, MC, NC, apply_lrelu)
    wb_kwargs = {"pipeline_mode": pl.Buffered(1)} if use_buf1 else {}

    out = pl.pallas_call(
        kernel,
        out_shape=jax.ShapeDtypeStruct((B, T_out_pad, C_out), jnp.bfloat16),
        grid=(n_gb, n_t),
        in_specs=[
            pl.BlockSpec((None, None, B, Tq_blk, Cblk), lambda gb, ti: (gb, ti, 0, 0, 0)),
            pl.BlockSpec((None, D * Cblk, Nout), lambda gb, ti: (gb, 0, 0), **wb_kwargs),
            pl.BlockSpec((None, 1, Nout), lambda gb, ti: (gb, 0, 0), **wb_kwargs),
        ],
        out_specs=pl.BlockSpec((B, Tt, Nout), lambda gb, ti: (0, ti, gb)),
        compiler_params=pltpu.CompilerParams(
            dimension_semantics=("parallel", "parallel"),
            vmem_limit_bytes=_VMEM_LIMIT),
    )(xg, w_packed, b_packed)

    return out[:, :T_out, :]


# --------------------------------------------------------------------------------------
# XLA helpers (memory-bound / 1-lane ops: not worth an MXU kernel, per perf review)
# --------------------------------------------------------------------------------------
def avg_pool_4_2_2(x):
    """AvgPool1d(4, 2, padding=2), count_include_pad=True. Pure XLA (memory-bound)."""
    B, T, C = x.shape
    T_out = T // 2 + 1
    xp = jnp.pad(x, ((0, 0), (2, 2), (0, 0))).astype(jnp.float32)
    out = sum(xp[:, j::2, :][:, :T_out, :] for j in range(4)) * 0.25
    return out.astype(x.dtype)


def post_conv_xla(x, w, b):
    """Final Conv1d(1024 -> 1, k=3, p=1). N=1 output lane -> plain XLA conv."""
    rhs = jnp.transpose(w, (2, 1, 0)).astype(jnp.bfloat16)     # (K, C_in, 1)
    out = lax.conv_general_dilated(
        x.astype(jnp.bfloat16), rhs, window_strides=(1,), padding=[(1, 1)],
        dimension_numbers=("NWC", "WIO", "NWC"),
        preferred_element_type=jnp.float32)
    return out + b[None, None, :].astype(jnp.float32)


# --------------------------------------------------------------------------------------
# Module: DiscriminatorS / MultiScaleDiscriminator
# --------------------------------------------------------------------------------------
def init_discriminator(key):
    """Synthetic PyTorch-default-init Conv1d weights, packed into the kernel layout."""
    convs = []
    for meta in CONV_META:
        key, kw, kb = jax.random.split(key, 3)
        cout, cig, K = meta["cout"], meta["cig"], meta["K"]
        bound = 1.0 / math.sqrt(cig * K)
        w_t = jax.random.uniform(kw, (cout, cig, K), jnp.float32, -bound, bound)
        b_t = jax.random.uniform(kb, (cout,), jnp.float32, -bound, bound)
        wp, bp = _pack_weight(w_t, b_t, meta)
        convs.append({"w": wp, "b": bp})
    key, kw, kb = jax.random.split(key, 3)
    cin_p, cout_p, K_p = DISC_POST[0], DISC_POST[1], DISC_POST[2]
    bound = 1.0 / math.sqrt(cin_p * K_p)
    post_w = jax.random.uniform(kw, (cout_p, cin_p, K_p), jnp.float32, -bound, bound)
    post_b = jax.random.uniform(kb, (cout_p,), jnp.float32, -bound, bound)
    return {"convs": convs, "post_w": post_w.astype(jnp.bfloat16), "post_b": post_b}


def discriminator_s(params, x):
    """DiscriminatorS.forward. x: (B, T, 1) bf16 channel-last. Returns (score, fmap)."""
    fmap = []
    for arrs, meta in zip(params["convs"], CONV_META):
        x = grouped_conv1d(x, arrs["w"], arrs["b"], meta, apply_lrelu=True)
        fmap.append(jnp.transpose(x, (0, 2, 1)))      # bf16 fmaps in PyTorch NCL layout
    x = post_conv_xla(x, params["post_w"], params["post_b"])    # (B, T_last, 1) f32
    fmap.append(jnp.transpose(x, (0, 2, 1)))
    score = x.reshape(x.shape[0], -1)                 # == torch.flatten(x, 1, -1)
    return score, fmap


def multi_scale_discriminator(all_params, y, y_hat):
    """MultiScaleDiscriminator.forward. y, y_hat: (B, 1, T) PyTorch NCL layout (f32)."""
    y = jnp.transpose(y, (0, 2, 1)).astype(jnp.bfloat16)
    y_hat = jnp.transpose(y_hat, (0, 2, 1)).astype(jnp.bfloat16)
    y_d_rs, y_d_gs, fmap_rs, fmap_gs = [], [], [], []
    for i, params in enumerate(all_params):
        if i != 0:
            y = avg_pool_4_2_2(y)
            y_hat = avg_pool_4_2_2(y_hat)
        y_d_r, fmap_r = discriminator_s(params, y)
        y_d_g, fmap_g = discriminator_s(params, y_hat)
        y_d_rs.append(y_d_r)
        fmap_rs.append(fmap_r)
        y_d_gs.append(y_d_g)
        fmap_gs.append(fmap_g)
    return y_d_rs, y_d_gs, fmap_rs, fmap_gs


msd_forward = jax.jit(multi_scale_discriminator)


# ----------------------------- correctness self-test -----------------------------
def _reference_grouped_conv(x, w_t, b_t, *, stride, padding, groups):
    lhs = x.astype(jnp.bfloat16)
    rhs = jnp.transpose(w_t, (2, 1, 0)).astype(jnp.bfloat16)   # (K, cig, C_out)
    out = lax.conv_general_dilated(
        lhs, rhs, window_strides=(stride,), padding=[(padding, padding)],
        dimension_numbers=("NWC", "WIO", "NWC"),
        feature_group_count=groups, preferred_element_type=jnp.float32)
    return out + b_t[None, None, :]


def _self_test(key):
    for (cin, cout, K, s, g, p) in [(1, 128, 15, 1, 1, 7),
                                    (128, 256, 41, 2, 16, 20),
                                    (256, 512, 41, 4, 16, 20)]:
        meta = _layer_meta(cin, cout, K, s, g, p)
        key, kx, kw, kb = jax.random.split(key, 4)
        cig = cin // g
        bound = 1.0 / math.sqrt(cig * K)
        w_t = jax.random.uniform(kw, (cout, cig, K), jnp.float32, -bound, bound)
        b_t = jax.random.uniform(kb, (cout,), jnp.float32, -bound, bound)
        x = jax.random.normal(kx, (2, 50, cin), jnp.float32)
        wp, bp = _pack_weight(w_t, b_t, meta)
        got = grouped_conv1d(x.astype(jnp.bfloat16), wp, bp, meta, apply_lrelu=False)
        ref = _reference_grouped_conv(x, w_t, b_t, stride=s, padding=p, groups=g)
        np.testing.assert_allclose(np.asarray(got.astype(jnp.float32)),
                                   np.asarray(ref), rtol=2e-2, atol=2e-2)


if __name__ == "__main__":
    key = jax.random.PRNGKey(0)
    k_test, k_params, k_y, k_g = jax.random.split(key, 4)

    # numerical check of the Pallas grouped conv against an XLA reference conv
    _self_test(k_test)

    B, T = 2, 64  # small synthetic audio: (batch=2, channels=1, samples=64)
    all_params = []
    for _ in range(3):  # three independent DiscriminatorS instances
        k_params, sub = jax.random.split(k_params)
        all_params.append(init_discriminator(sub))

    y = jax.random.normal(k_y, (B, 1, T), jnp.float32)
    y_hat = jax.random.normal(k_g, (B, 1, T), jnp.float32)

    outs = msd_forward(all_params, y, y_hat)
    y_d_rs, y_d_gs, fmap_rs, fmap_gs = jax.block_until_ready(outs)

    # structural sanity checks (3 scales, 8 fmaps per discriminator call)
    assert len(y_d_rs) == 3 and len(y_d_gs) == 3
    assert len(fmap_rs) == 3 and all(len(f) == 8 for f in fmap_rs)
    assert len(fmap_gs) == 3 and all(len(f) == 8 for f in fmap_gs)
    assert fmap_rs[0][0].shape == (B, 128, T)          # first conv fmap at scale 0
    assert y_d_rs[0].ndim == 2 and y_d_rs[0].shape[0] == B

    print("KERNEL_OK")
</pallas_src>

<mosaic_0001>
module attributes {stable_mosaic.version = 11 : i64} {
  func.func @k(%arg0: i32, %arg1: memref<1x8x128xf32, #tpu.memory_space<vmem>>, %arg2: memref<1x8x128xf32, #tpu.memory_space<vmem>>, %arg3: memref<1x8x128xf32, #tpu.memory_space<vmem>>) attributes {dimension_semantics = [#tpu.dimension_semantics<arbitrary>], iteration_bounds = array<i64: 4>, scalar_prefetch = 0 : i64, scratch_operands = 0 : i64, tpu.core_type = #tpu.core_type<tc>, window_params = [{transform_indices = @transform_0, window_bounds = array<i64: 1, 8, 128>}, {pipeline_mode = #tpu.pipeline_mode<synchronous>, transform_indices = @transform_1, window_bounds = array<i64: 1, 8, 128>}, {transform_indices = @transform_2, window_bounds = array<i64: 1, 8, 128>}]} {
    %c0 = arith.constant 0 : index
    %c0_0 = arith.constant 0 : index
    %c0_1 = arith.constant 0 : index
    %0 = vector.load %arg1[%c0, %c0_0, %c0_1] : memref<1x8x128xf32, #tpu.memory_space<vmem>>, vector<1x8x128xf32>
    %1 = vector.shape_cast %0 : vector<1x8x128xf32> to vector<8x128xf32>
    %c0_2 = arith.constant 0 : index
    %c0_3 = arith.constant 0 : index
    %c0_4 = arith.constant 0 : index
    %2 = vector.load %arg2[%c0_2, %c0_3, %c0_4] : memref<1x8x128xf32, #tpu.memory_space<vmem>>, vector<1x8x128xf32>
    %3 = vector.shape_cast %2 : vector<1x8x128xf32> to vector<8x128xf32>
    %4 = arith.addf %1, %3 : vector<8x128xf32>
    %c0_5 = arith.constant 0 : index
    %c0_6 = arith.constant 0 : index
    %c0_7 = arith.constant 0 : index
    %5 = vector.load %arg3[%c0_5, %c0_6, %c0_7] : memref<1x8x128xf32, #tpu.memory_space<vmem>>, vector<1x8x128xf32>
    %6 = vector.shape_cast %5 : vector<1x8x128xf32> to vector<8x128xf32>
    %7 = vector.shape_cast %4 : vector<8x128xf32> to vector<1x8x128xf32>
    tpu.vector_store %arg3[%c0_5, %c0_6, %c0_7], %7 {strides = array<i32>} : memref<1x8x128xf32, #tpu.memory_space<vmem>>, vector<1x8x128xf32>,
    return
  }
  func.func @transform_0(%arg0: i32) -> (i32, i32, i32) {
    %c0_i32 = arith.constant 0 : i32
    %c0_i32_0 = arith.constant 0 : i32
    %c0_i32_1 = arith.constant 0 : i32
    return %arg0, %c0_i32, %c0_i32_0 : i32, i32, i32
  }
  func.func @transform_1(%arg0: i32) -> (i32, i32, i32) {
    %c0_i32 = arith.constant 0 : i32
    %c0_i32_0 = arith.constant 0 : i32
    %c0_i32_1 = arith.constant 0 : i32
    return %arg0, %c0_i32, %c0_i32_0 : i32, i32, i32
  }
  func.func @transform_2(%arg0: i32) -> (i32, i32, i32) {
    %c0_i32 = arith.constant 0 : i32
    %c0_i32_0 = arith.constant 0 : i32
    %c0_i32_1 = arith.constant 0 : i32
    return %arg0, %c0_i32, %c0_i32_0 : i32, i32, i32
  }
}

module attributes {stable_mosaic.version = 11 : i64} {
  func.func @kernel(%arg0: i32, %arg1: i32, %arg2: memref<1x1x2x256x15xbf16, #tpu.memory_space<vmem>>, %arg3: memref<1x15x128xbf16, #tpu.memory_space<vmem>>, %arg4: memref<1x1x128xf32, #tpu.memory_space<vmem>>, %arg5: memref<2x256x128xbf16, #tpu.memory_space<vmem>>) attributes {dimension_semantics = [#tpu.dimension_semantics<parallel>, #tpu.dimension_semantics<parallel>], iteration_bounds = array<i64: 1, 1>, scalar_prefetch = 0 : i64, scratch_operands = 0 : i64, tpu.core_type = #tpu.core_type<tc>, window_params = [{transform_indices = @transform_0, window_bounds = array<i64: 1, 1, 2, 256, 15>}, {transform_indices = @transform_1, window_bounds = array<i64: 1, 15, 128>}, {transform_indices = @transform_2, window_bounds = array<i64: 1, 1, 128>}, {transform_indices = @transform_3, window_bounds = array<i64: 2, 256, 128>}]} {
    %c0 = arith.constant 0 : index
    %c0_0 = arith.constant 0 : index
    %c0_1 = arith.constant 0 : index
    %0 = vector.load %arg4[%c0, %c0_0, %c0_1] : memref<1x1x128xf32, #tpu.memory_space<vmem>>, vector<1x1x128xf32>
    %1 = vector.shape_cast %0 : vector<1x1x128xf32> to vector<1x128xf32>
    %c0_2 = arith.constant 0 : index
    %c0_3 = arith.constant 0 : index
    %c0_4 = arith.constant 0 : index
    %c0_5 = arith.constant 0 : index
    %c0_6 = arith.constant 0 : index
    %2 = vector.load %arg2[%c0_2, %c0_3, %c0_4, %c0_5, %c0_6] : memref<1x1x2x256x15xbf16, #tpu.memory_space<vmem>>, vector<1x1x1x256x15xbf16>
    %3 = vector.shape_cast %2 : vector<1x1x1x256x15xbf16> to vector<256x15xbf16>
    %c0_7 = arith.constant 0 : index
    %c0_8 = arith.constant 0 : index
    %c0_9 = arith.constant 0 : index
    %4 = vector.load %arg3[%c0_7, %c0_8, %c0_9] : memref<1x15x128xbf16, #tpu.memory_space<vmem>>, vector<1x15x128xbf16>
    %5 = vector.shape_cast %4 : vector<1x15x128xbf16> to vector<15x128xbf16>
    %cst = arith.constant dense<0.000000e+00> : vector<256x128xf32>
    %6 = tpu.matmul %3, %5, %cst {dimension_numbers = #tpu.dot_dimension_numbers<[1], [0], [0], [1], [0, 0, 1, 1], [], []>} : vector<256x15xbf16>, vector<15x128xbf16>, vector<256x128xf32> -> vector<256x128xf32>
    %7 = vector.broadcast %1 : vector<1x128xf32> to vector<256x128xf32>
    %8 = arith.addf %6, %7 : vector<256x128xf32>
    %9 = arith.truncf %8 : vector<256x128xf32> to vector<256x128xbf16>
    %c0_10 = arith.constant 0 : index
    %c0_11 = arith.constant 0 : index
    %c0_12 = arith.constant 0 : index
    %10 = vector.load %arg5[%c0_10, %c0_11, %c0_12] : memref<2x256x128xbf16, #tpu.memory_space<vmem>>, vector<1x256x128xbf16>
    %11 = vector.shape_cast %10 : vector<1x256x128xbf16> to vector<256x128xbf16>
    %12 = vector.shape_cast %9 : vector<256x128xbf16> to vector<1x256x128xbf16>
    tpu.vector_store %arg5[%c0_10, %c0_11, %c0_12], %12 {strides = array<i32>} : memref<2x256x128xbf16, #tpu.memory_space<vmem>>, vector<1x256x128xbf16>,
    %c0_13 = arith.constant 0 : index
    %c0_14 = arith.constant 0 : index
    %c1 = arith.constant 1 : index
    %c0_15 = arith.constant 0 : index
    %c0_16 = arith.constant 0 : index
    %13 = vector.load %arg2[%c0_13, %c0_14, %c1, %c0_15, %c0_16] : memref<1x1x2x256x15xbf16, #tpu.memory_space<vmem>>, vector<1x1x1x256x15xbf16>
    %14 = vector.shape_cast %13 : vector<1x1x1x256x15xbf16> to vector<256x15xbf16>
    %c0_17 = arith.constant 0 : index
    %c0_18 = arith.constant 0 : index
    %c0_19 = arith.constant 0 : index
    %15 = vector.load %arg3[%c0_17, %c0_18, %c0_19] : memref<1x15x128xbf16, #tpu.memory_space<vmem>>, vector<1x15x128xbf16>
    %16 = vector.shape_cast %15 : vector<1x15x128xbf16> to vector<15x128xbf16>
    %cst_20 = arith.constant dense<0.000000e+00> : vector<256x128xf32>
    %17 = tpu.matmul %14, %16, %cst_20 {dimension_numbers = #tpu.dot_dimension_numbers<[1], [0], [0], [1], [0, 0, 1, 1], [], []>} : vector<256x15xbf16>, vector<15x128xbf16>, vector<256x128xf32> -> vector<256x128xf32>
    %18 = vector.broadcast %1 : vector<1x128xf32> to vector<256x128xf32>
    %19 = arith.addf %17, %18 : vector<256x128xf32>
    %20 = arith.truncf %19 : vector<256x128xf32> to vector<256x128xbf16>
    %c1_21 = arith.constant 1 : index
    %c0_22 = arith.constant 0 : index
    %c0_23 = arith.constant 0 : index
    %21 = vector.load %arg5[%c1_21, %c0_22, %c0_23] : memref<2x256x128xbf16, #tpu.memory_space<vmem>>, vector<1x256x128xbf16>
    %22 = vector.shape_cast %21 : vector<1x256x128xbf16> to vector<256x128xbf16>
    %23 = vector.shape_cast %20 : vector<256x128xbf16> to vector<1x256x128xbf16>
    tpu.vector_store %arg5[%c1_21, %c0_22, %c0_23], %23 {strides = array<i32>} : memref<2x256x128xbf16, #tpu.memory_space<vmem>>, vector<1x256x128xbf16>,
    return
  }
  func.func @transform_0(%arg0: i32, %arg1: i32) -> (i32, i32, i32, i32, i32) {
    %c0_i32 = arith.constant 0 : i32
    %c0_i32_0 = arith.constant 0 : i32
    %c0_i32_1 = arith.constant 0 : i32
    %c0_i32_2 = arith.constant 0 : i32
    return %arg0, %arg1, %c0_i32, %c0_i32_0, %c0_i32_1 : i32, i32, i32, i32, i32
  }
  func.func @transform_1(%arg0: i32, %arg1: i32) -> (i32, i32, i32) {
    %c0_i32 = arith.constant 0 : i32
    %c0_i32_0 = arith.constant 0 : i32
    %c0_i32_1 = arith.constant 0 : i32
    return %arg0, %c0_i32, %c0_i32_0 : i32, i32, i32
  }
  func.func @transform_2(%arg0: i32, %arg1: i32) -> (i32, i32, i32) {
    %c0_i32 = arith.constant 0 : i32
    %c0_i32_0 = arith.constant 0 : i32
    %c0_i32_1 = arith.constant 0 : i32
    return %arg0, %c0_i32, %c0_i32_0 : i32, i32, i32
  }
  func.func @transform_3(%arg0: i32, %arg1: i32) -> (i32, i32, i32) {
    %c0_i32 = arith.constant 0 : i32
    %c0_i32_0 = arith.constant 0 : i32
    return %c0_i32, %arg1, %arg0 : i32, i32, i32
  }
}

</mosaic_0001>

<llo_original>
// kernel: tpu_custom_call.1
$region0: #{tpu_custom_call.1}
  #allocation0 [shape = 'u32[]', space=smem, size = 0x4, offset = 0x4, fixed_abs, tag = 'smem constant byte address 0x4 - core index']
  #allocation1 [shape = 'u32[144,128]{1,0:T(1,128)}', space=vmem, size = 0x12000, scoped, tag = 'internal scratch']
  %s0 = inlined_call_operand.hbm [shape: f32[4,8,128], index: 0, kind: input, shape index: {}]
  %s1 = inlined_call_operand.hbm [shape: f32[4,8,128], index: 1, kind: input, shape index: {}]
  %s2 = inlined_call_operand.hbm [shape: f32[4,8,128], index: 2, kind: output, shape index: {}]
  %s3 = sld [smem:[#allocation0]]
  $region49: #{tpu_custom_call.1} parent=0
    _
  %s5 = ssub.s32 1, %s3
  %s6 = scalar_select 0, %s5, %s3
  $region1: #{tpu_custom_call.1} parent=0
    #allocation2 [shape = 'u8[8192]{0}', space=vmem, size = 0x2000, scoped, tag = 'input window, operand 0']
    #allocation3 [shape = 's32[2]{0}', space=sflag, size = 0x8, scoped, tag = 'scoped memory for tpu_custom_call.1']
    #allocation4 [shape = 's32[2]{0}', space=sflag, size = 0x8, scoped, tag = 'scoped memory for tpu_custom_call.1']
    #allocation5 [shape = 'u8[4096]{0}', space=vmem, size = 0x1000, scoped, tag = 'input window, operand 1, single buffered']
    #allocation6 [shape = 's32[1]{0}', space=sflag, size = 0x4, scoped, tag = 'scoped memory for tpu_custom_call.1']
    #allocation7 [shape = 'u8[8192]{0}', space=vmem, size = 0x2000, scoped, tag = 'output window, operand 0']
    %7 = vsyncpa [#allocation3], 0
    %s8 = scalar_lea.sflag [#allocation3], 1
    %9 = vsyncpa %s8, 0
    %10 = vsyncpa [#allocation6], 0
    %11 = vsyncpa [#allocation4], 0
    %s12 = scalar_lea.sflag [#allocation4], 1
    %13 = vsyncpa %s12, 0
    loop: start=0, step=1, limit=6
    $region2: #{tpu_custom_call.1} parent=1 // loop_pre_header
      _
    $region3: #{tpu_custom_call.1} parent=1 // loop_header
      %s15 = sphi 0, %s19
      %p16 = scmp.ge.s32.totalorder %s15, 6
      %s25 = sphi 0, %s27
      %s28 = sphi 0, %s25
      %s29 = sphi 0, %s28
      %s45 = sphi 0, %s29
      %s51 = sphi 0, %s53
      %s54 = sphi 0, %s51
      %s55 = sphi 0, %s54
      %s71 = sphi 0, %s55
      %s77 = sphi 0, %s79
      %s80 = sphi 0, %s77
      %s81 = sphi 0, %s80
      %s97 = sphi 0, %s81
    $region4: #{tpu_custom_call.1} parent=1 // loop_header_branch
      %18 = sbr.rel (%p16) target = $region8
    $region5: #{tpu_custom_call.1} parent=1 // loop_body
      %s20 = ssub.s32 %s15, 1
      %s21 = ssub.s32 %s15, 2
      %s22 = sadd.s32 %s15, 1
      %s23 = ssub.s32 %s15, %s22
      %p24 = scmp.eq.s32.totalorder %s23, 0
      %s26 = sadd.s32 %s25, 1
      %s27 = scalar_select %p24, %s25, %s26
      %p30 = pneg %p24
      %p31 = scmp.eq.s32.totalorder %s15, 3
      %p32 = por %p30, %p31
      %p33 = scmp.ne.s32.totalorder %s25, %s28
      %p34 = scmp.eq.s32.totalorder %s15, 0
      %p35 = por %p33, %p34
      %p36 = scmp.ne.s32.totalorder %s25, %s28
      %p37 = scmp.eq.s32.totalorder %s20, 3
      %p38 = por %p36, %p37
      %p39 = scmp.ne.s32.totalorder %s28, %s29
      %p40 = scmp.eq.s32.totalorder %s20, 0
      %p41 = por %p39, %p40
      %p42 = scmp.ne.s32.totalorder %s28, %s29
      %p43 = scmp.eq.s32.totalorder %s21, 3
      %p44 = por %p42, %p43
      %p46 = scmp.ne.s32.totalorder %s29, %s45
      %p47 = scmp.eq.s32.totalorder %s21, 0
      %p48 = por %p46, %p47
      %s49 = ssub.s32 %s15, %s22
      %p50 = scmp.eq.s32.totalorder %s49, 0
      %s52 = sadd.s32 %s51, 1
      %s53 = scalar_select %p50, %s51, %s52
      %p56 = pneg %p50
      %p57 = scmp.eq.s32.totalorder %s15, 3
      %p58 = por %p56, %p57
      %p59 = scmp.ne.s32.totalorder %s51, %s54
      %p60 = scmp.eq.s32.totalorder %s15, 0
      %p61 = por %p59, %p60
      %p62 = scmp.ne.s32.totalorder %s51, %s54
      %p63 = scmp.eq.s32.totalorder %s20, 3
      %p64 = por %p62, %p63
      %p65 = scmp.ne.s32.totalorder %s54, %s55
      %p66 = scmp.eq.s32.totalorder %s20, 0
      %p67 = por %p65, %p66
      %p68 = scmp.ne.s32.totalorder %s54, %s55
      %p69 = scmp.eq.s32.totalorder %s21, 3
      %p70 = por %p68, %p69
      %p72 = scmp.ne.s32.totalorder %s55, %s71
      %p73 = scmp.eq.s32.totalorder %s21, 0
      %p74 = por %p72, %p73
      %s75 = ssub.s32 %s15, %s22
      %p76 = scmp.eq.s32.totalorder %s75, 0
      %s78 = sadd.s32 %s77, 1
      %s79 = scalar_select %p76, %s77, %s78
      %p82 = pneg %p76
      %p83 = scmp.eq.s32.totalorder %s15, 3
      %p84 = por %p82, %p83
      %p85 = scmp.ne.s32.totalorder %s77, %s80
      %p86 = scmp.eq.s32.totalorder %s15, 0
      %p87 = por %p85, %p86
      %p88 = scmp.ne.s32.totalorder %s77, %s80
      %p89 = scmp.eq.s32.totalorder %s20, 3
      %p90 = por %p88, %p89
      %p91 = scmp.ne.s32.totalorder %s80, %s81
      %p92 = scmp.eq.s32.totalorder %s20, 0
      %p93 = por %p91, %p92
      %p94 = scmp.ne.s32.totalorder %s80, %s81
      %p95 = scmp.eq.s32.totalorder %s21, 3
      %p96 = por %p94, %p95
      %p98 = scmp.ne.s32.totalorder %s81, %s97
      %p99 = scmp.eq.s32.totalorder %s21, 0
      %p100 = por %p98, %p99
      %p101 = scmp.le.s32.totalorder 1, %s15
      %p102 = scmp.lt.s32.totalorder %s15, 5
      %p103 = pnand %p101, %p102
      %p104 = pneg %p103
      // Predicated region
      $region9: #{tpu_custom_call.1} parent=5 // pred_check
        _
      $region10: #{tpu_custom_call.1} parent=5 // pred_check_branch
        %106 = sbr.rel (%p103) target = $region12
      $region11: #{tpu_custom_call.1} parent=5 // pred_region
        %s107 = ssub.s32 %s15, 1
        // Predicated region
        $region13: #{tpu_custom_call.1} parent=11 // pred_check
          %p108 = pneg %p67
        $region14: #{tpu_custom_call.1} parent=11 // pred_check_branch
          %110 = sbr.rel (%p108) target = $region16
        $region15: #{tpu_custom_call.1} parent=11 // pred_region
          %s112 = ssub.s32 128, 128
          %113 = vsyncadd [#allocation6], %s112
          %s114 = smul.addr %s20, 128
          %s115 = scalar_lea.hbm %s1, %s114
          %s117 = sshll.u32 [#allocation5], 4
          %s118 = int_to_ptr.vmem [resolvable:$true] %s117
          %120 = dma.hbm_to_vmem [thread:$0]  %s115, 128, %s118, [#allocation6]
        $region16: #{tpu_custom_call.1} parent=11 // pred_fallthru
          _
      $region12: #{tpu_custom_call.1} parent=5 // pred_fallthru
        _
      %p121 = scmp.lt.s32.totalorder %s15, 4
      // Predicated region
      $region17: #{tpu_custom_call.1} parent=5 // pred_check
        %p122 = pneg %p121
      $region18: #{tpu_custom_call.1} parent=5 // pred_check_branch
        %124 = sbr.rel (%p122) target = $region20
      $region19: #{tpu_custom_call.1} parent=5 // pred_region
        // Predicated region
        $region21: #{tpu_custom_call.1} parent=19 // pred_check
          %p125 = pneg %p35
        $region22: #{tpu_custom_call.1} parent=19 // pred_check_branch
          %127 = sbr.rel (%p125) target = $region24
        $region23: #{tpu_custom_call.1} parent=19 // pred_region
          %s128 = sand.u32 %s25, 1
          %s129 = scalar_lea.sflag [#allocation3], %s128
          %s130 = sand.u32 %s25, 1
          %s131 = smul.addr %s130, 8
          %s132 = scalar_lea.vmem [#allocation2], %s131
          %s134 = ssub.s32 128, 128
          %135 = vsyncadd %s129, %s134
          %s136 = smul.addr %s15, 128
          %s137 = scalar_lea.hbm %s0, %s136
          %s139 = sshll.u32 %s132, 4
          %s140 = int_to_ptr.vmem [resolvable:$true] %s139
          %142 = dma.hbm_to_vmem [thread:$0]  %s137, 128, %s140, %s129
        $region24: #{tpu_custom_call.1} parent=19 // pred_fallthru
          _
      $region20: #{tpu_custom_call.1} parent=5 // pred_fallthru
        _
      %p143 = scmp.le.s32.totalorder 1, %s15
      %p144 = scmp.lt.s32.totalorder %s15, 5
      %p145 = pnand %p143, %p144
      %p146 = pneg %p145
      // Predicated region
      $region25: #{tpu_custom_call.1} parent=5 // pred_check
        _
      $region26: #{tpu_custom_call.1} parent=5 // pred_check_branch
        %148 = sbr.rel (%p145) target = $region28
      $region27: #{tpu_custom_call.1} parent=5 // pred_region
        %s149 = ssub.s32 %s15, 1
        %s150 = sand.u32 %s28, 1
        %s151 = scalar_lea.sflag [#allocation3], %s150
        %s152 = sand.u32 %s28, 1
        %s153 = smul.addr %s152, 8
        %s154 = scalar_lea.vmem [#allocation2], %s153
        // Predicated region
        $region29: #{tpu_custom_call.1} parent=27 // pred_check
          %p155 = pneg %p41
        $region30: #{tpu_custom_call.1} parent=27 // pred_check_branch
          %157 = sbr.rel (%p155) target = $region32
        $region31: #{tpu_custom_call.1} parent=27 // pred_region
          %158 = dma.done %s151, 128
        $region32: #{tpu_custom_call.1} parent=27 // pred_fallthru
          _
        // Predicated region
        $region33: #{tpu_custom_call.1} parent=27 // pred_check
          %p159 = pneg %p67
        $region34: #{tpu_custom_call.1} parent=27 // pred_check_branch
          %161 = sbr.rel (%p159) target = $region36
        $region35: #{tpu_custom_call.1} parent=27 // pred_region
          %162 = dma.done [#allocation6], 128
        $region36: #{tpu_custom_call.1} parent=27 // pred_fallthru
          _
        %s163 = sand.u32 %s28, 1
        %s164 = scalar_lea.sflag [#allocation3], %s163
        %s165 = sand.u32 %s28, 1
        %s166 = smul.addr %s165, 8
        %s167 = scalar_lea.vmem [#allocation2], %s166
        %p168 = pneg %p41
        %p169 = pneg %p38
        %p170 = pneg %p67
        %p171 = pneg %p64
        %p172 = pneg %p93
        %p173 = pneg %p90
        %s174 = sand.u32 %s80, 1
        %s175 = scalar_lea.sflag [#allocation4], %s174
        %s176 = sand.u32 %s80, 1
        %s177 = smul.addr %s176, 8
        %s178 = scalar_lea.vmem [#allocation7], %s177
        %v179 = vld [vmem:[%s154] sm:$0xff]
        %v180 = vld [vmem:[#allocation5] sm:$0xff]
        %v181 = vadd.f32 %v179, %v180
        %182 = vst [vmem:[%s178] sm:$0xff] %v181
        %s183 = sand.u32 %s80, 1
        %s184 = scalar_lea.sflag [#allocation4], %s183
        %s185 = sand.u32 %s80, 1
        %s186 = smul.addr %s185, 8
        %s187 = scalar_lea.vmem [#allocation7], %s186
        // Predicated region
        $region37: #{tpu_custom_call.1} parent=27 // pred_check
          %p188 = pneg %p90
        $region38: #{tpu_custom_call.1} parent=27 // pred_check_branch
          %190 = sbr.rel (%p188) target = $region40
        $region39: #{tpu_custom_call.1} parent=27 // pred_region
          %s192 = ssub.s32 128, 128
          %193 = vsyncadd %s184, %s192
          %s194 = smul.addr %s20, 128
          %s195 = scalar_lea.hbm %s2, %s194
          %s197 = sshll.u32 %s187, 4
          %s198 = int_to_ptr.vmem [resolvable:$true] %s197
          %200 = dma.vmem_to_hbm [thread:$0]  %s198, 128, %s195, %s184
        $region40: #{tpu_custom_call.1} parent=27 // pred_fallthru
          _
      $region28: #{tpu_custom_call.1} parent=5 // pred_fallthru
        _
      %p201 = scmp.le.s32.totalorder 2, %s15
      // Predicated region
      $region41: #{tpu_custom_call.1} parent=5 // pred_check
        %p202 = pneg %p201
      $region42: #{tpu_custom_call.1} parent=5 // pred_check_branch
        %204 = sbr.rel (%p202) target = $region44
      $region43: #{tpu_custom_call.1} parent=5 // pred_region
        %s205 = ssub.s32 %s15, 2
        // Predicated region
        $region45: #{tpu_custom_call.1} parent=43 // pred_check
          %p206 = pneg %p96
        $region46: #{tpu_custom_call.1} parent=43 // pred_check_branch
          %208 = sbr.rel (%p206) target = $region48
        $region47: #{tpu_custom_call.1} parent=43 // pred_region
          %s209 = sand.u32 %s81, 1
          %s210 = scalar_lea.sflag [#allocation4], %s209
          %s211 = sand.u32 %s81, 1
          %s212 = smul.addr %s211, 8
          %s213 = scalar_lea.vmem [#allocation7], %s212
          %214 = dma.done %s210, 128
        $region48: #{tpu_custom_call.1} parent=43 // pred_fallthru
          _
      $region44: #{tpu_custom_call.1} parent=5 // pred_fallthru
        _
    $region6: #{tpu_custom_call.1} parent=1 // loop_footer
      %s19 = sadd.s32 1, %s15
    $region7: #{tpu_custom_call.1} parent=1 // loop_footer_branch
      %14 = sbr.rel target = $region3
    $region8: #{tpu_custom_call.1} parent=1 // loop_exit
      _
    %215 = vsyncpa [#allocation3], 1
    %s216 = scalar_lea.sflag [#allocation3], 1
    %217 = vsyncpa %s216, 1
    %218 = vsyncpa [#allocation6], 1
    %219 = vsyncpa [#allocation4], 1
    %s220 = scalar_lea.sflag [#allocation4], 1
    %221 = vsyncpa %s220, 1

// kernel: tpu_custom_call.1
$region0: #{tpu_custom_call.1}
  #allocation0 [shape = 'u32[]', space=smem, size = 0x4, offset = 0x4, fixed_abs, tag = 'smem constant byte address 0x4 - core index']
  #allocation1 [shape = 'u32[144,128]{1,0:T(1,128)}', space=vmem, size = 0x12000, scoped, tag = 'internal scratch']
  %s0 = inlined_call_operand.vmem [shape: bf16[1,1,2,256,15], index: 0, kind: input, shape index: {}]
  %s1 = inlined_call_operand.vmem [shape: bf16[1,15,128], index: 1, kind: input, shape index: {}]
  %s2 = inlined_call_operand.vmem [shape: f32[1,1,128], index: 2, kind: input, shape index: {}]
  %s3 = inlined_call_operand.hbm [shape: bf16[2,256,128], index: 3, kind: output, shape index: {}]
  %s4 = sld [smem:[#allocation0]]
  $region22: #{tpu_custom_call.1} parent=0
    _
  %s6 = ssub.s32 1, %s4
  %s7 = scalar_select 0, %s6, %s4
  $region1: #{tpu_custom_call.1} parent=0
    #allocation2 [shape = 'u8[131072]{0}', space=vmem, size = 0x20000, scoped, tag = 'output window, operand 0, single buffered']
    #allocation3 [shape = 's32[1]{0}', space=sflag, size = 0x4, scoped, tag = 'scoped memory for tpu_custom_call.1']
    %8 = vsyncpa [#allocation3], 0
    // Predicated region
    $region2: #{tpu_custom_call.1} parent=1 // pred_check
      _
    $region3: #{tpu_custom_call.1} parent=1 // pred_check_branch
      %10 = sbr.rel (0) target = $region5
    $region4: #{tpu_custom_call.1} parent=1 // pred_region
      _
    $region5: #{tpu_custom_call.1} parent=1 // pred_fallthru
      _
    // Predicated region
    $region6: #{tpu_custom_call.1} parent=1 // pred_check
      _
    $region7: #{tpu_custom_call.1} parent=1 // pred_check_branch
      %12 = sbr.rel (0) target = $region9
    $region8: #{tpu_custom_call.1} parent=1 // pred_region
      _
    $region9: #{tpu_custom_call.1} parent=1 // pred_fallthru
      _
    // Predicated region
    $region10: #{tpu_custom_call.1} parent=1 // pred_check
      _
    $region11: #{tpu_custom_call.1} parent=1 // pred_check_branch
      %14 = sbr.rel (0) target = $region13
    $region12: #{tpu_custom_call.1} parent=1 // pred_region
      _
    $region13: #{tpu_custom_call.1} parent=1 // pred_fallthru
      _
    %v16 = vld [vmem:[%s2] sm:$0x1]
    %v17 = vld [vmem:[%s0] sm:$0xf]
    %v18 = vld [vmem:[%s0 + $0x4] sm:$0xf]
    %v19 = vld [vmem:[%s0 + $0x8] sm:$0xf]
    %v20 = vld [vmem:[%s0 + $0xc] sm:$0xf]
    %v21 = vld [vmem:[%s0 + $0x10] sm:$0xf]
    %v22 = vld [vmem:[%s0 + $0x14] sm:$0xf]
    %v23 = vld [vmem:[%s0 + $0x18] sm:$0xf]
    %v24 = vld [vmem:[%s0 + $0x1c] sm:$0xf]
    %v25 = vld [vmem:[%s0 + $0x20] sm:$0xf]
    %v26 = vld [vmem:[%s0 + $0x24] sm:$0xf]
    %v27 = vld [vmem:[%s0 + $0x28] sm:$0xf]
    %v28 = vld [vmem:[%s0 + $0x2c] sm:$0xf]
    %v29 = vld [vmem:[%s0 + $0x30] sm:$0xf]
    %v30 = vld [vmem:[%s0 + $0x34] sm:$0xf]
    %v31 = vld [vmem:[%s0 + $0x38] sm:$0xf]
    %v32 = vld [vmem:[%s0 + $0x3c] sm:$0xf]
    %v33 = vld [vmem:[%s0 + $0x40] sm:$0xf]
    %v34 = vld [vmem:[%s0 + $0x44] sm:$0xf]
    %v35 = vld [vmem:[%s0 + $0x48] sm:$0xf]
    %v36 = vld [vmem:[%s0 + $0x4c] sm:$0xf]
    %v37 = vld [vmem:[%s0 + $0x50] sm:$0xf]
    %v38 = vld [vmem:[%s0 + $0x54] sm:$0xf]
    %v39 = vld [vmem:[%s0 + $0x58] sm:$0xf]
    %v40 = vld [vmem:[%s0 + $0x5c] sm:$0xf]
    %v41 = vld [vmem:[%s0 + $0x60] sm:$0xf]
    %v42 = vld [vmem:[%s0 + $0x64] sm:$0xf]
    %v43 = vld [vmem:[%s0 + $0x68] sm:$0xf]
    %v44 = vld [vmem:[%s0 + $0x6c] sm:$0xf]
    %v45 = vld [vmem:[%s0 + $0x70] sm:$0xf]
    %v46 = vld [vmem:[%s0 + $0x74] sm:$0xf]
    %v47 = vld [vmem:[%s0 + $0x78] sm:$0xf]
    %v48 = vld [vmem:[%s0 + $0x7c] sm:$0xf]
    %v49 = vld [vmem:[%s1] sm:$0xf]
    %v50 = vld [vmem:[%s1 + $0x4] sm:$0xf]
    %v52 = vlaneseq
    %v53 = vshrl.u32 %v52, 7
    %v54 = vsub.s32 0, %v53
    %v55 = vrot.slane %v16, %v54
    %v89 = vunpack.c.l.b16 %v17
    %v90 = vunpack.c.l.b16 %v18
    %v91 = vunpack.c.l.b16 %v19
    %v92 = vunpack.c.l.b16 %v20
    %v93 = vunpack.c.l.b16 %v21
    %v94 = vunpack.c.l.b16 %v22
    %v95 = vunpack.c.l.b16 %v23
    %v96 = vunpack.c.l.b16 %v24
    %v97 = vunpack.c.l.b16 %v25
    %v98 = vunpack.c.l.b16 %v26
    %v99 = vunpack.c.l.b16 %v27
    %v100 = vunpack.c.l.b16 %v28
    %v101 = vunpack.c.l.b16 %v29
    %v102 = vunpack.c.l.b16 %v30
    %v103 = vunpack.c.l.b16 %v31
    %v104 = vunpack.c.l.b16 %v32
    %v105 = vunpack.c.l.b16 %v33
    %v106 = vunpack.c.l.b16 %v34
    %v107 = vunpack.c.l.b16 %v35
    %v108 = vunpack.c.l.b16 %v36
    %v109 = vunpack.c.l.b16 %v37
    %v110 = vunpack.c.l.b16 %v38
    %v111 = vunpack.c.l.b16 %v39
    %v112 = vunpack.c.l.b16 %v40
    %v113 = vunpack.c.l.b16 %v41
    %v114 = vunpack.c.l.b16 %v42
    %v115 = vunpack.c.l.b16 %v43
    %v116 = vunpack.c.l.b16 %v44
    %v117 = vunpack.c.l.b16 %v45
    %v118 = vunpack.c.l.b16 %v46
    %v119 = vunpack.c.l.b16 %v47
    %v120 = vunpack.c.l.b16 %v48
    %v121 = vpack.c.b16 %v90, %v89
    %v122 = vpack.c.b16 %v92, %v91
    %v123 = vpack.c.b16 %v94, %v93
    %v124 = vpack.c.b16 %v96, %v95
    %v125 = vpack.c.b16 %v98, %v97
    %v126 = vpack.c.b16 %v100, %v99
    %v127 = vpack.c.b16 %v102, %v101
    %v128 = vpack.c.b16 %v104, %v103
    %v129 = vpack.c.b16 %v106, %v105
    %v130 = vpack.c.b16 %v108, %v107
    %v131 = vpack.c.b16 %v110, %v109
    %v132 = vpack.c.b16 %v112, %v111
    %v133 = vpack.c.b16 %v114, %v113
    %v134 = vpack.c.b16 %v116, %v115
    %v135 = vpack.c.b16 %v118, %v117
    %v136 = vpack.c.b16 %v120, %v119
    %v139 = vunpack.c.l.b16 %v49
    %v140 = vunpack.c.l.b16 %v50
    %v141 = vpack.c.b16 %v140, %v139
    %vm142 = vcmask 121856
    %v144 = vsel %vm142, %v121, 0
    %v147 = vsel %vm142, %v122, 0
    %v150 = vsel %vm142, %v123, 0
    %v153 = vsel %vm142, %v124, 0
    %v156 = vsel %vm142, %v125, 0
    %v159 = vsel %vm142, %v126, 0
    %v162 = vsel %vm142, %v127, 0
    %v165 = vsel %vm142, %v128, 0
    %v168 = vsel %vm142, %v129, 0
    %v171 = vsel %vm142, %v130, 0
    %v174 = vsel %vm142, %v131, 0
    %v177 = vsel %vm142, %v132, 0
    %v180 = vsel %vm142, %v133, 0
    %v183 = vsel %vm142, %v134, 0
    %v186 = vsel %vm142, %v135, 0
    %v189 = vsel %vm142, %v136, 0
    %vm191 = vcmask 1046528
    %vm192 = vcmask 1047552
    %v193 = vsel %vm191, 4294967295, 65535
    %v194 = vsel %vm192, %v193, 0
    %v196 = vand.u32 %v141, %v194
    %198 = vmatprep.subr.bf16.mxu0 0
    %199 = vmatpush1.bf16.msra.mxu0 %v196
    %200 = vmatprep.subr.bf16.mxu0 0
    %201 = vmatpush1.bf16.msra.mxu0 0
    %202 = vmatprep.subr.bf16.mxu0 0
    %203 = vmatpush1.bf16.msra.mxu0 0
    %204 = vmatprep.subr.bf16.mxu0 0
    %205 = vmatpush1.bf16.msra.mxu0 0
    %206 = vmatprep.subr.bf16.mxu0 0
    %207 = vmatpush1.bf16.msra.mxu0 0
    %208 = vmatprep.subr.bf16.mxu0 0
    %209 = vmatpush1.bf16.msra.mxu0 0
    %210 = vmatprep.subr.bf16.mxu0 0
    %211 = vmatpush1.bf16.msra.mxu0 0
    %212 = vmatprep.subr.bf16.mxu0 0
    %213 = vmatpush1.bf16.msra.mxu0 0
    %214 = vmatprep.subr.bf16.mxu0 0
    %215 = vmatpush1.bf16.msra.mxu0 0
    %216 = vmatprep.subr.bf16.mxu0 0
    %217 = vmatpush1.bf16.msra.mxu0 0
    %218 = vmatprep.subr.bf16.mxu0 0
    %219 = vmatpush1.bf16.msra.mxu0 0
    %220 = vmatprep.subr.bf16.mxu0 0
    %221 = vmatpush1.bf16.msra.mxu0 0
    %222 = vmatprep.subr.bf16.mxu0 0
    %223 = vmatpush1.bf16.msra.mxu0 0
    %224 = vmatprep.subr.bf16.mxu0 0
    %225 = vmatpush1.bf16.msra.mxu0 0
    %226 = vmatprep.subr.bf16.mxu0 0
    %227 = vmatpush1.bf16.msra.mxu0 0
    %228 = vmatprep.subr.bf16.mxu0 0
    %229 = vmatpush1.bf16.msra.mxu0 0
    %230 = vmatprep.mubr.bf16.mxu0 0
    %231 = vmatmul.mubr.bf16.gmra.mrb[0].mxu0 %v144
    %v232 = vpop.f32.mrb[0].mxu0
    %v233 = vadd.f32 %v55, %v232
    %v234 = vpop.f32.mrb[0].mxu0
    %v235 = vpop.f32.mrb[0].mxu0
    %v236 = vadd.f32 %v55, %v235
    %v237 = vpop.f32.mrb[0].mxu0
    %238 = vmatprep.mubr.bf16.mxu0 0
    %239 = vmatmul.mubr.bf16.gmra.mrb[0].mxu0 %v147
    %v240 = vpop.f32.mrb[0].mxu0
    %v241 = vadd.f32 %v55, %v240
    %v242 = vpop.f32.mrb[0].mxu0
    %v243 = vpop.f32.mrb[0].mxu0
    %v244 = vadd.f32 %v55, %v243
    %v245 = vpop.f32.mrb[0].mxu0
    %246 = vmatprep.mubr.bf16.mxu0 0
    %247 = vmatmul.mubr.bf16.gmra.mrb[0].mxu0 %v150
    %v248 = vpop.f32.mrb[0].mxu0
    %v249 = vadd.f32 %v55, %v248
    %v250 = vpop.f32.mrb[0].mxu0
    %v251 = vpop.f32.mrb[0].mxu0
    %v252 = vadd.f32 %v55, %v251
    %v253 = vpop.f32.mrb[0].mxu0
    %254 = vmatprep.mubr.bf16.mxu0 0
    %255 = vmatmul.mubr.bf16.gmra.mrb[0].mxu0 %v153
    %v256 = vpop.f32.mrb[0].mxu0
    %v257 = vadd.f32 %v55, %v256
    %v258 = vpop.f32.mrb[0].mxu0
    %v259 = vpop.f32.mrb[0].mxu0
    %v260 = vadd.f32 %v55, %v259
    %v261 = vpop.f32.mrb[0].mxu0
    %262 = vmatprep.mubr.bf16.mxu0 0
    %263 = vmatmul.mubr.bf16.gmra.mrb[0].mxu0 %v156
    %v264 = vpop.f32.mrb[0].mxu0
    %v265 = vadd.f32 %v55, %v264
    %v266 = vpop.f32.mrb[0].mxu0
    %v267 = vpop.f32.mrb[0].mxu0
    %v268 = vadd.f32 %v55, %v267
    %v269 = vpop.f32.mrb[0].mxu0
    %270 = vmatprep.mubr.bf16.mxu0 0
    %271 = vmatmul.mubr.bf16.gmra.mrb[0].mxu0 %v159
    %v272 = vpop.f32.mrb[0].mxu0
    %v273 = vadd.f32 %v55, %v272
    %v274 = vpop.f32.mrb[0].mxu0
    %v275 = vpop.f32.mrb[0].mxu0
    %v276 = vadd.f32 %v55, %v275
    %v277 = vpop.f32.mrb[0].mxu0
    %278 = vmatprep.mubr.bf16.mxu0 0
    %279 = vmatmul.mubr.bf16.gmra.mrb[0].mxu0 %v162
    %v280 = vpop.f32.mrb[0].mxu0
    %v281 = vadd.f32 %v55, %v280
    %v282 = vpop.f32.mrb[0].mxu0
    %v283 = vpop.f32.mrb[0].mxu0
    %v284 = vadd.f32 %v55, %v283
    %v285 = vpop.f32.mrb[0].mxu0
    %286 = vmatprep.mubr.bf16.mxu0 0
    %287 = vmatmul.mubr.bf16.gmra.mrb[0].mxu0 %v165
    %v288 = vpop.f32.mrb[0].mxu0
    %v289 = vadd.f32 %v55, %v288
    %v290 = vpop.f32.mrb[0].mxu0
    %v291 = vpop.f32.mrb[0].mxu0
    %v292 = vadd.f32 %v55, %v291
    %v293 = vpop.f32.mrb[0].mxu0
    %294 = vmatprep.mubr.bf16.mxu0 0
    %295 = vmatmul.mubr.bf16.gmra.mrb[0].mxu0 %v168
    %v296 = vpop.f32.mrb[0].mxu0
    %v297 = vadd.f32 %v55, %v296
    %v298 = vpop.f32.mrb[0].mxu0
    %v299 = vpop.f32.mrb[0].mxu0
    %v300 = vadd.f32 %v55, %v299
    %v301 = vpop.f32.mrb[0].mxu0
    %302 = vmatprep.mubr.bf16.mxu0 0
    %303 = vmatmul.mubr.bf16.gmra.mrb[0].mxu0 %v171
    %v304 = vpop.f32.mrb[0].mxu0
    %v305 = vadd.f32 %v55, %v304
    %v306 = vpop.f32.mrb[0].mxu0
    %v307 = vpop.f32.mrb[0].mxu0
    %v308 = vadd.f32 %v55, %v307
    %v309 = vpop.f32.mrb[0].mxu0
    %310 = vmatprep.mubr.bf16.mxu0 0
    %311 = vmatmul.mubr.bf16.gmra.mrb[0].mxu0 %v174
    %v312 = vpop.f32.mrb[0].mxu0
    %v313 = vadd.f32 %v55, %v312
    %v314 = vpop.f32.mrb[0].mxu0
    %v315 = vpop.f32.mrb[0].mxu0
    %v316 = vadd.f32 %v55, %v315
    %v317 = vpop.f32.mrb[0].mxu0
    %318 = vmatprep.mubr.bf16.mxu0 0
    %319 = vmatmul.mubr.bf16.gmra.mrb[0].mxu0 %v177
    %v320 = vpop.f32.mrb[0].mxu0
    %v321 = vadd.f32 %v55, %v320
    %v322 = vpop.f32.mrb[0].mxu0
    %v323 = vpop.f32.mrb[0].mxu0
    %v324 = vadd.f32 %v55, %v323
    %v325 = vpop.f32.mrb[0].mxu0
    %326 = vmatprep.mubr.bf16.mxu0 0
    %327 = vmatmul.mubr.bf16.gmra.mrb[0].mxu0 %v180
    %v328 = vpop.f32.mrb[0].mxu0
    %v329 = vadd.f32 %v55, %v328
    %v330 = vpop.f32.mrb[0].mxu0
    %v331 = vpop.f32.mrb[0].mxu0
    %v332 = vadd.f32 %v55, %v331
    %v333 = vpop.f32.mrb[0].mxu0
    %334 = vmatprep.mubr.bf16.mxu0 0
    %335 = vmatmul.mubr.bf16.gmra.mrb[0].mxu0 %v183
    %v336 = vpop.f32.mrb[0].mxu0
    %v337 = vadd.f32 %v55, %v336
    %v338 = vpop.f32.mrb[0].mxu0
    %v339 = vpop.f32.mrb[0].mxu0
    %v340 = vadd.f32 %v55, %v339
    %v341 = vpop.f32.mrb[0].mxu0
    %342 = vmatprep.mubr.bf16.mxu0 0
    %343 = vmatmul.mubr.bf16.gmra.mrb[0].mxu0 %v186
    %v344 = vpop.f32.mrb[0].mxu0
    %v345 = vadd.f32 %v55, %v344
    %v346 = vpop.f32.mrb[0].mxu0
    %v347 = vpop.f32.mrb[0].mxu0
    %v348 = vadd.f32 %v55, %v347
    %v349 = vpop.f32.mrb[0].mxu0
    %350 = vmatprep.mubr.bf16.mxu0 0
    %351 = vmatmul.mubr.bf16.gmra.mrb[0].mxu0 %v189
    %v352 = vpop.f32.mrb[0].mxu0
    %v353 = vadd.f32 %v55, %v352
    %v354 = vpop.f32.mrb[0].mxu0
    %v355 = vpop.f32.mrb[0].mxu0
    %v356 = vadd.f32 %v55, %v355
    %v357 = vpop.f32.mrb[0].mxu0
    %358 = vdwg.mxu0
    %v359 = vpack.c.bf16 %v236, %v233
    %v360 = vpack.c.bf16 %v244, %v241
    %v361 = vpack.c.bf16 %v252, %v249
    %v362 = vpack.c.bf16 %v260, %v257
    %v363 = vpack.c.bf16 %v268, %v265
    %v364 = vpack.c.bf16 %v276, %v273
    %v365 = vpack.c.bf16 %v284, %v281
    %v366 = vpack.c.bf16 %v292, %v289
    %v367 = vpack.c.bf16 %v300, %v297
    %v368 = vpack.c.bf16 %v308, %v305
    %v369 = vpack.c.bf16 %v316, %v313
    %v370 = vpack.c.bf16 %v324, %v321
    %v371 = vpack.c.bf16 %v332, %v329
    %v372 = vpack.c.bf16 %v340, %v337
    %v373 = vpack.c.bf16 %v348, %v345
    %v374 = vpack.c.bf16 %v356, %v353
    %v391 = vunpack.c.l.b16 %v359
    %v392 = vunpack.c.h.b16 %v359
    %v393 = vunpack.c.l.b16 %v360
    %v394 = vunpack.c.h.b16 %v360
    %v395 = vunpack.c.l.b16 %v361
    %v396 = vunpack.c.h.b16 %v361
    %v397 = vunpack.c.l.b16 %v362
    %v398 = vunpack.c.h.b16 %v362
    %v399 = vunpack.c.l.b16 %v363
    %v400 = vunpack.c.h.b16 %v363
    %v401 = vunpack.c.l.b16 %v364
    %v402 = vunpack.c.h.b16 %v364
    %v403 = vunpack.c.l.b16 %v365
    %v404 = vunpack.c.h.b16 %v365
    %v405 = vunpack.c.l.b16 %v366
    %v406 = vunpack.c.h.b16 %v366
    %v407 = vunpack.c.l.b16 %v367
    %v408 = vunpack.c.h.b16 %v367
    %v409 = vunpack.c.l.b16 %v368
    %v410 = vunpack.c.h.b16 %v368
    %v411 = vunpack.c.l.b16 %v369
    %v412 = vunpack.c.h.b16 %v369
    %v413 = vunpack.c.l.b16 %v370
    %v414 = vunpack.c.h.b16 %v370
    %v415 = vunpack.c.l.b16 %v371
    %v416 = vunpack.c.h.b16 %v371
    %v417 = vunpack.c.l.b16 %v372
    %v418 = vunpack.c.h.b16 %v372
    %v419 = vunpack.c.l.b16 %v373
    %v420 = vunpack.c.h.b16 %v373
    %v421 = vunpack.c.l.b16 %v374
    %v422 = vunpack.c.h.b16 %v374
    %v423 = vpack.c.b16 %v391, %v391
    %v424 = vpack.c.b16 %v392, %v392
    %v425 = vpack.c.b16 %v393, %v393
    %v426 = vpack.c.b16 %v394, %v394
    %v427 = vpack.c.b16 %v395, %v395
    %v428 = vpack.c.b16 %v396, %v396
    %v429 = vpack.c.b16 %v397, %v397
    %v430 = vpack.c.b16 %v398, %v398
    %v431 = vpack.c.b16 %v399, %v399
    %v432 = vpack.c.b16 %v400, %v400
    %v433 = vpack.c.b16 %v401, %v401
    %v434 = vpack.c.b16 %v402, %v402
    %v435 = vpack.c.b16 %v403, %v403
    %v436 = vpack.c.b16 %v404, %v404
    %v437 = vpack.c.b16 %v405, %v405
    %v438 = vpack.c.b16 %v406, %v406
    %v439 = vpack.c.b16 %v407, %v407
    %v440 = vpack.c.b16 %v408, %v408
    %v441 = vpack.c.b16 %v409, %v409
    %v442 = vpack.c.b16 %v410, %v410
    %v443 = vpack.c.b16 %v411, %v411
    %v444 = vpack.c.b16 %v412, %v412
    %v445 = vpack.c.b16 %v413, %v413
    %v446 = vpack.c.b16 %v414, %v414
    %v447 = vpack.c.b16 %v415, %v415
    %v448 = vpack.c.b16 %v416, %v416
    %v449 = vpack.c.b16 %v417, %v417
    %v450 = vpack.c.b16 %v418, %v418
    %v451 = vpack.c.b16 %v419, %v419
    %v452 = vpack.c.b16 %v420, %v420
    %v453 = vpack.c.b16 %v421, %v421
    %v454 = vpack.c.b16 %v422, %v422
    %487 = vst [vmem:[#allocation2] sm:$0xf] %v423
    %488 = vst [vmem:[#allocation2 + $0x4] sm:$0xf] %v424
    %489 = vst [vmem:[#allocation2 + $0x8] sm:$0xf] %v425
    %490 = vst [vmem:[#allocation2 + $0xc] sm:$0xf] %v426
    %491 = vst [vmem:[#allocation2 + $0x10] sm:$0xf] %v427
    %492 = vst [vmem:[#allocation2 + $0x14] sm:$0xf] %v428
    %493 = vst [vmem:[#allocation2 + $0x18] sm:$0xf] %v429
    %494 = vst [vmem:[#allocation2 + $0x1c] sm:$0xf] %v430
    %495 = vst [vmem:[#allocation2 + $0x20] sm:$0xf] %v431
    %496 = vst [vmem:[#allocation2 + $0x24] sm:$0xf] %v432
    %497 = vst [vmem:[#allocation2 + $0x28] sm:$0xf] %v433
    %498 = vst [vmem:[#allocation2 + $0x2c] sm:$0xf] %v434
    %499 = vst [vmem:[#allocation2 + $0x30] sm:$0xf] %v435
    %500 = vst [vmem:[#allocation2 + $0x34] sm:$0xf] %v436
    %501 = vst [vmem:[#allocation2 + $0x38] sm:$0xf] %v437
    %502 = vst [vmem:[#allocation2 + $0x3c] sm:$0xf] %v438
    %503 = vst [vmem:[#allocation2 + $0x40] sm:$0xf] %v439
    %504 = vst [vmem:[#allocation2 + $0x44] sm:$0xf] %v440
    %505 = vst [vmem:[#allocation2 + $0x48] sm:$0xf] %v441
    %506 = vst [vmem:[#allocation2 + $0x4c] sm:$0xf] %v442
    %507 = vst [vmem:[#allocation2 + $0x50] sm:$0xf] %v443
    %508 = vst [vmem:[#allocation2 + $0x54] sm:$0xf] %v444
    %509 = vst [vmem:[#allocation2 + $0x58] sm:$0xf] %v445
    %510 = vst [vmem:[#allocation2 + $0x5c] sm:$0xf] %v446
    %511 = vst [vmem:[#allocation2 + $0x60] sm:$0xf] %v447
    %512 = vst [vmem:[#allocation2 + $0x64] sm:$0xf] %v448
    %513 = vst [vmem:[#allocation2 + $0x68] sm:$0xf] %v449
    %514 = vst [vmem:[#allocation2 + $0x6c] sm:$0xf] %v450
    %515 = vst [vmem:[#allocation2 + $0x70] sm:$0xf] %v451
    %516 = vst [vmem:[#allocation2 + $0x74] sm:$0xf] %v452
    %517 = vst [vmem:[#allocation2 + $0x78] sm:$0xf] %v453
    %518 = vst [vmem:[#allocation2 + $0x7c] sm:$0xf] %v454
    %s519 = scalar_lea.vmem %s0, 128
    %v520 = vld [vmem:[%s519] sm:$0xf]
    %v521 = vld [vmem:[%s519 + $0x4] sm:$0xf]
    %v522 = vld [vmem:[%s519 + $0x8] sm:$0xf]
    %v523 = vld [vmem:[%s519 + $0xc] sm:$0xf]
    %v524 = vld [vmem:[%s519 + $0x10] sm:$0xf]
    %v525 = vld [vmem:[%s519 + $0x14] sm:$0xf]
    %v526 = vld [vmem:[%s519 + $0x18] sm:$0xf]
    %v527 = vld [vmem:[%s519 + $0x1c] sm:$0xf]
    %v528 = vld [vmem:[%s519 + $0x20] sm:$0xf]
    %v529 = vld [vmem:[%s519 + $0x24] sm:$0xf]
    %v530 = vld [vmem:[%s519 + $0x28] sm:$0xf]
    %v531 = vld [vmem:[%s519 + $0x2c] sm:$0xf]
    %v532 = vld [vmem:[%s519 + $0x30] sm:$0xf]
    %v533 = vld [vmem:[%s519 + $0x34] sm:$0xf]
    %v534 = vld [vmem:[%s519 + $0x38] sm:$0xf]
    %v535 = vld [vmem:[%s519 + $0x3c] sm:$0xf]
    %v536 = vld [vmem:[%s519 + $0x40] sm:$0xf]
    %v537 = vld [vmem:[%s519 + $0x44] sm:$0xf]
    %v538 = vld [vmem:[%s519 + $0x48] sm:$0xf]
    %v539 = vld [vmem:[%s519 + $0x4c] sm:$0xf]
    %v540 = vld [vmem:[%s519 + $0x50] sm:$0xf]
    %v541 = vld [vmem:[%s519 + $0x54] sm:$0xf]
    %v542 = vld [vmem:[%s519 + $0x58] sm:$0xf]
    %v543 = vld [vmem:[%s519 + $0x5c] sm:$0xf]
    %v544 = vld [vmem:[%s519 + $0x60] sm:$0xf]
    %v545 = vld [vmem:[%s519 + $0x64] sm:$0xf]
    %v546 = vld [vmem:[%s519 + $0x68] sm:$0xf]
    %v547 = vld [vmem:[%s519 + $0x6c] sm:$0xf]
    %v548 = vld [vmem:[%s519 + $0x70] sm:$0xf]
    %v549 = vld [vmem:[%s519 + $0x74] sm:$0xf]
    %v550 = vld [vmem:[%s519 + $0x78] sm:$0xf]
    %v551 = vld [vmem:[%s519 + $0x7c] sm:$0xf]
    %v552 = vld [vmem:[%s1] sm:$0xf]
    %v553 = vld [vmem:[%s1 + $0x4] sm:$0xf]
    %v586 = vunpack.c.l.b16 %v520
    %v587 = vunpack.c.l.b16 %v521
    %v588 = vunpack.c.l.b16 %v522
    %v589 = vunpack.c.l.b16 %v523
    %v590 = vunpack.c.l.b16 %v524
    %v591 = vunpack.c.l.b16 %v525
    %v592 = vunpack.c.l.b16 %v526
    %v593 = vunpack.c.l.b16 %v527
    %v594 = vunpack.c.l.b16 %v528
    %v595 = vunpack.c.l.b16 %v529
    %v596 = vunpack.c.l.b16 %v530
    %v597 = vunpack.c.l.b16 %v531
    %v598 = vunpack.c.l.b16 %v532
    %v599 = vunpack.c.l.b16 %v533
    %v600 = vunpack.c.l.b16 %v534
    %v601 = vunpack.c.l.b16 %v535
    %v602 = vunpack.c.l.b16 %v536
    %v603 = vunpack.c.l.b16 %v537
    %v604 = vunpack.c.l.b16 %v538
    %v605 = vunpack.c.l.b16 %v539
    %v606 = vunpack.c.l.b16 %v540
    %v607 = vunpack.c.l.b16 %v541
    %v608 = vunpack.c.l.b16 %v542
    %v609 = vunpack.c.l.b16 %v543
    %v610 = vunpack.c.l.b16 %v544
    %v611 = vunpack.c.l.b16 %v545
    %v612 = vunpack.c.l.b16 %v546
    %v613 = vunpack.c.l.b16 %v547
    %v614 = vunpack.c.l.b16 %v548
    %v615 = vunpack.c.l.b16 %v549
    %v616 = vunpack.c.l.b16 %v550
    %v617 = vunpack.c.l.b16 %v551
    %v618 = vpack.c.b16 %v587, %v586
    %v619 = vpack.c.b16 %v589, %v588
    %v620 = vpack.c.b16 %v591, %v590
    %v621 = vpack.c.b16 %v593, %v592
    %v622 = vpack.c.b16 %v595, %v594
    %v623 = vpack.c.b16 %v597, %v596
    %v624 = vpack.c.b16 %v599, %v598
    %v625 = vpack.c.b16 %v601, %v600
    %v626 = vpack.c.b16 %v603, %v602
    %v627 = vpack.c.b16 %v605, %v604
    %v628 = vpack.c.b16 %v607, %v606
    %v629 = vpack.c.b16 %v609, %v608
    %v630 = vpack.c.b16 %v611, %v610
    %v631 = vpack.c.b16 %v613, %v612
    %v632 = vpack.c.b16 %v615, %v614
    %v633 = vpack.c.b16 %v617, %v616
    %v636 = vunpack.c.l.b16 %v552
    %v637 = vunpack.c.l.b16 %v553
    %v638 = vpack.c.b16 %v637, %v636
    %v640 = vsel %vm142, %v618, 0
    %v643 = vsel %vm142, %v619, 0
    %v646 = vsel %vm142, %v620, 0
    %v649 = vsel %vm142, %v621, 0
    %v652 = vsel %vm142, %v622, 0
    %v655 = vsel %vm142, %v623, 0
    %v658 = vsel %vm142, %v624, 0
    %v661 = vsel %vm142, %v625, 0
    %v664 = vsel %vm142, %v626, 0
    %v667 = vsel %vm142, %v627, 0
    %v670 = vsel %vm142, %v628, 0
    %v673 = vsel %vm142, %v629, 0
    %v676 = vsel %vm142, %v630, 0
    %v679 = vsel %vm142, %v631, 0
    %v682 = vsel %vm142, %v632, 0
    %v685 = vsel %vm142, %v633, 0
    %v688 = vand.u32 %v638, %v194
    %690 = vmatprep.subr.bf16.mxu0 0
    %691 = vmatpush1.bf16.msra.mxu0 %v688
    %692 = vmatprep.subr.bf16.mxu0 0
    %693 = vmatpush1.bf16.msra.mxu0 0
    %694 = vmatprep.subr.bf16.mxu0 0
    %695 = vmatpush1.bf16.msra.mxu0 0
    %696 = vmatprep.subr.bf16.mxu0 0
    %697 = vmatpush1.bf16.msra.mxu0 0
    %698 = vmatprep.subr.bf16.mxu0 0
    %699 = vmatpush1.bf16.msra.mxu0 0
    %700 = vmatprep.subr.bf16.mxu0 0
    %701 = vmatpush1.bf16.msra.mxu0 0
    %702 = vmatprep.subr.bf16.mxu0 0
    %703 = vmatpush1.bf16.msra.mxu0 0
    %704 = vmatprep.subr.bf16.mxu0 0
    %705 = vmatpush1.bf16.msra.mxu0 0
    %706 = vmatprep.subr.bf16.mxu0 0
    %707 = vmatpush1.bf16.msra.mxu0 0
    %708 = vmatprep.subr.bf16.mxu0 0
    %709 = vmatpush1.bf16.msra.mxu0 0
    %710 = vmatprep.subr.bf16.mxu0 0
    %711 = vmatpush1.bf16.msra.mxu0 0
    %712 = vmatprep.subr.bf16.mxu0 0
    %713 = vmatpush1.bf16.msra.mxu0 0
    %714 = vmatprep.subr.bf16.mxu0 0
    %715 = vmatpush1.bf16.msra.mxu0 0
    %716 = vmatprep.subr.bf16.mxu0 0
    %717 = vmatpush1.bf16.msra.mxu0 0
    %718 = vmatprep.subr.bf16.mxu0 0
    %719 = vmatpush1.bf16.msra.mxu0 0
    %720 = vmatprep.subr.bf16.mxu0 0
    %721 = vmatpush1.bf16.msra.mxu0 0
    %722 = vmatprep.mubr.bf16.mxu0 0
    %723 = vmatmul.mubr.bf16.gmra.mrb[0].mxu0 %v640
    %v724 = vpop.f32.mrb[0].mxu0
    %v725 = vadd.f32 %v55, %v724
    %v726 = vpop.f32.mrb[0].mxu0
    %v727 = vpop.f32.mrb[0].mxu0
    %v728 = vadd.f32 %v55, %v727
    %v729 = vpop.f32.mrb[0].mxu0
    %730 = vmatprep.mubr.bf16.mxu0 0
    %731 = vmatmul.mubr.bf16.gmra.mrb[0].mxu0 %v643
    %v732 = vpop.f32.mrb[0].mxu0
    %v733 = vadd.f32 %v55, %v732
    %v734 = vpop.f32.mrb[0].mxu0
    %v735 = vpop.f32.mrb[0].mxu0
    %v736 = vadd.f32 %v55, %v735
    %v737 = vpop.f32.mrb[0].mxu0
    %738 = vmatprep.mubr.bf16.mxu0 0
    %739 = vmatmul.mubr.bf16.gmra.mrb[0].mxu0 %v646
    %v740 = vpop.f32.mrb[0].mxu0
    %v741 = vadd.f32 %v55, %v740
    %v742 = vpop.f32.mrb[0].mxu0
    %v743 = vpop.f32.mrb[0].mxu0
    %v744 = vadd.f32 %v55, %v743
    %v745 = vpop.f32.mrb[0].mxu0
    %746 = vmatprep.mubr.bf16.mxu0 0
    %747 = vmatmul.mubr.bf16.gmra.mrb[0].mxu0 %v649
    %v748 = vpop.f32.mrb[0].mxu0
    %v749 = vadd.f32 %v55, %v748
    %v750 = vpop.f32.mrb[0].mxu0
    %v751 = vpop.f32.mrb[0].mxu0
    %v752 = vadd.f32 %v55, %v751
    %v753 = vpop.f32.mrb[0].mxu0
    %754 = vmatprep.mubr.bf16.mxu0 0
    %755 = vmatmul.mubr.bf16.gmra.mrb[0].mxu0 %v652
    %v756 = vpop.f32.mrb[0].mxu0
    %v757 = vadd.f32 %v55, %v756
    %v758 = vpop.f32.mrb[0].mxu0
    %v759 = vpop.f32.mrb[0].mxu0
    %v760 = vadd.f32 %v55, %v759
    %v761 = vpop.f32.mrb[0].mxu0
    %762 = vmatprep.mubr.bf16.mxu0 0
    %763 = vmatmul.mubr.bf16.gmra.mrb[0].mxu0 %v655
    %v764 = vpop.f32.mrb[0].mxu0
    %v765 = vadd.f32 %v55, %v764
    %v766 = vpop.f32.mrb[0].mxu0
    %v767 = vpop.f32.mrb[0].mxu0
    %v768 = vadd.f32 %v55, %v767
    %v769 = vpop.f32.mrb[0].mxu0
    %770 = vmatprep.mubr.bf16.mxu0 0
    %771 = vmatmul.mubr.bf16.gmra.mrb[0].mxu0 %v658
    %v772 = vpop.f32.mrb[0].mxu0
    %v773 = vadd.f32 %v55, %v772
    %v774 = vpop.f32.mrb[0].mxu0
    %v775 = vpop.f32.mrb[0].mxu0
    %v776 = vadd.f32 %v55, %v775
    %v777 = vpop.f32.mrb[0].mxu0
    %778 = vmatprep.mubr.bf16.mxu0 0
    %779 = vmatmul.mubr.bf16.gmra.mrb[0].mxu0 %v661
    %v780 = vpop.f32.mrb[0].mxu0
    %v781 = vadd.f32 %v55, %v780
    %v782 = vpop.f32.mrb[0].mxu0
    %v783 = vpop.f32.mrb[0].mxu0
    %v784 = vadd.f32 %v55, %v783
    %v785 = vpop.f32.mrb[0].mxu0
    %786 = vmatprep.mubr.bf16.mxu0 0
    %787 = vmatmul.mubr.bf16.gmra.mrb[0].mxu0 %v664
    %v788 = vpop.f32.mrb[0].mxu0
    %v789 = vadd.f32 %v55, %v788
    %v790 = vpop.f32.mrb[0].mxu0
    %v791 = vpop.f32.mrb[0].mxu0
    %v792 = vadd.f32 %v55, %v791
    %v793 = vpop.f32.mrb[0].mxu0
    %794 = vmatprep.mubr.bf16.mxu0 0
    %795 = vmatmul.mubr.bf16.gmra.mrb[0].mxu0 %v667
    %v796 = vpop.f32.mrb[0].mxu0
    %v797 = vadd.f32 %v55, %v796
    %v798 = vpop.f32.mrb[0].mxu0
    %v799 = vpop.f32.mrb[0].mxu0
    %v800 = vadd.f32 %v55, %v799
    %v801 = vpop.f32.mrb[0].mxu0
    %802 = vmatprep.mubr.bf16.mxu0 0
    %803 = vmatmul.mubr.bf16.gmra.mrb[0].mxu0 %v670
    %v804 = vpop.f32.mrb[0].mxu0
    %v805 = vadd.f32 %v55, %v804
    %v806 = vpop.f32.mrb[0].mxu0
    %v807 = vpop.f32.mrb[0].mxu0
    %v808 = vadd.f32 %v55, %v807
    %v809 = vpop.f32.mrb[0].mxu0
    %810 = vmatprep.mubr.bf16.mxu0 0
    %811 = vmatmul.mubr.bf16.gmra.mrb[0].mxu0 %v673
    %v812 = vpop.f32.mrb[0].mxu0
    %v813 = vadd.f32 %v55, %v812
    %v814 = vpop.f32.mrb[0].mxu0
    %v815 = vpop.f32.mrb[0].mxu0
    %v816 = vadd.f32 %v55, %v815
    %v817 = vpop.f32.mrb[0].mxu0
    %818 = vmatprep.mubr.bf16.mxu0 0
    %819 = vmatmul.mubr.bf16.gmra.mrb[0].mxu0 %v676
    %v820 = vpop.f32.mrb[0].mxu0
    %v821 = vadd.f32 %v55, %v820
    %v822 = vpop.f32.mrb[0].mxu0
    %v823 = vpop.f32.mrb[0].mxu0
    %v824 = vadd.f32 %v55, %v823
    %v825 = vpop.f32.mrb[0].mxu0
    %826 = vmatprep.mubr.bf16.mxu0 0
    %827 = vmatmul.mubr.bf16.gmra.mrb[0].mxu0 %v679
    %v828 = vpop.f32.mrb[0].mxu0
    %v829 = vadd.f32 %v55, %v828
    %v830 = vpop.f32.mrb[0].mxu0
    %v831 = vpop.f32.mrb[0].mxu0
    %v832 = vadd.f32 %v55, %v831
    %v833 = vpop.f32.mrb[0].mxu0
    %834 = vmatprep.mubr.bf16.mxu0 0
    %835 = vmatmul.mubr.bf16.gmra.mrb[0].mxu0 %v682
    %v836 = vpop.f32.mrb[0].mxu0
    %v837 = vadd.f32 %v55, %v836
    %v838 = vpop.f32.mrb[0].mxu0
    %v839 = vpop.f32.mrb[0].mxu0
    %v840 = vadd.f32 %v55, %v839
    %v841 = vpop.f32.mrb[0].mxu0
    %842 = vmatprep.mubr.bf16.mxu0 0
    %843 = vmatmul.mubr.bf16.gmra.mrb[0].mxu0 %v685
    %v844 = vpop.f32.mrb[0].mxu0
    %v845 = vadd.f32 %v55, %v844
    %v846 = vpop.f32.mrb[0].mxu0
    %v847 = vpop.f32.mrb[0].mxu0
    %v848 = vadd.f32 %v55, %v847
    %v849 = vpop.f32.mrb[0].mxu0
    %850 = vdwg.mxu0
    %v851 = vpack.c.bf16 %v728, %v725
    %v852 = vpack.c.bf16 %v736, %v733
    %v853 = vpack.c.bf16 %v744, %v741
    %v854 = vpack.c.bf16 %v752, %v749
    %v855 = vpack.c.bf16 %v760, %v757
    %v856 = vpack.c.bf16 %v768, %v765
    %v857 = vpack.c.bf16 %v776, %v773
    %v858 = vpack.c.bf16 %v784, %v781
    %v859 = vpack.c.bf16 %v792, %v789
    %v860 = vpack.c.bf16 %v800, %v797
    %v861 = vpack.c.bf16 %v808, %v805
    %v862 = vpack.c.bf16 %v816, %v813
    %v863 = vpack.c.bf16 %v824, %v821
    %v864 = vpack.c.bf16 %v832, %v829
    %v865 = vpack.c.bf16 %v840, %v837
    %v866 = vpack.c.bf16 %v848, %v845
    %v883 = vunpack.c.l.b16 %v851
    %v884 = vunpack.c.h.b16 %v851
    %v885 = vunpack.c.l.b16 %v852
    %v886 = vunpack.c.h.b16 %v852
    %v887 = vunpack.c.l.b16 %v853
    %v888 = vunpack.c.h.b16 %v853
    %v889 = vunpack.c.l.b16 %v854
    %v890 = vunpack.c.h.b16 %v854
    %v891 = vunpack.c.l.b16 %v855
    %v892 = vunpack.c.h.b16 %v855
    %v893 = vunpack.c.l.b16 %v856
    %v894 = vunpack.c.h.b16 %v856
    %v895 = vunpack.c.l.b16 %v857
    %v896 = vunpack.c.h.b16 %v857
    %v897 = vunpack.c.l.b16 %v858
    %v898 = vunpack.c.h.b16 %v858
    %v899 = vunpack.c.l.b16 %v859
    %v900 = vunpack.c.h.b16 %v859
    %v901 = vunpack.c.l.b16 %v860
    %v902 = vunpack.c.h.b16 %v860
    %v903 = vunpack.c.l.b16 %v861
    %v904 = vunpack.c.h.b16 %v861
    %v905 = vunpack.c.l.b16 %v862
    %v906 = vunpack.c.h.b16 %v862
    %v907 = vunpack.c.l.b16 %v863
    %v908 = vunpack.c.h.b16 %v863
    %v909 = vunpack.c.l.b16 %v864
    %v910 = vunpack.c.h.b16 %v864
    %v911 = vunpack.c.l.b16 %v865
    %v912 = vunpack.c.h.b16 %v865
    %v913 = vunpack.c.l.b16 %v866
    %v914 = vunpack.c.h.b16 %v866
    %v915 = vpack.c.b16 %v883, %v883
    %v916 = vpack.c.b16 %v884, %v884
    %v917 = vpack.c.b16 %v885, %v885
    %v918 = vpack.c.b16 %v886, %v886
    %v919 = vpack.c.b16 %v887, %v887
    %v920 = vpack.c.b16 %v888, %v888
    %v921 = vpack.c.b16 %v889, %v889
    %v922 = vpack.c.b16 %v890, %v890
    %v923 = vpack.c.b16 %v891, %v891
    %v924 = vpack.c.b16 %v892, %v892
    %v925 = vpack.c.b16 %v893, %v893
    %v926 = vpack.c.b16 %v894, %v894
    %v927 = vpack.c.b16 %v895, %v895
    %v928 = vpack.c.b16 %v896, %v896
    %v929 = vpack.c.b16 %v897, %v897
    %v930 = vpack.c.b16 %v898, %v898
    %v931 = vpack.c.b16 %v899, %v899
    %v932 = vpack.c.b16 %v900, %v900
    %v933 = vpack.c.b16 %v901, %v901
    %v934 = vpack.c.b16 %v902, %v902
    %v935 = vpack.c.b16 %v903, %v903
    %v936 = vpack.c.b16 %v904, %v904
    %v937 = vpack.c.b16 %v905, %v905
    %v938 = vpack.c.b16 %v906, %v906
    %v939 = vpack.c.b16 %v907, %v907
    %v940 = vpack.c.b16 %v908, %v908
    %v941 = vpack.c.b16 %v909, %v909
    %v942 = vpack.c.b16 %v910, %v910
    %v943 = vpack.c.b16 %v911, %v911
    %v944 = vpack.c.b16 %v912, %v912
    %v945 = vpack.c.b16 %v913, %v913
    %v946 = vpack.c.b16 %v914, %v914
    %s979 = scalar_lea.vmem [#allocation2], 128
    %980 = vst [vmem:[%s979] sm:$0xf] %v915
    %981 = vst [vmem:[%s979 + $0x4] sm:$0xf] %v916
    %982 = vst [vmem:[%s979 + $0x8] sm:$0xf] %v917
    %983 = vst [vmem:[%s979 + $0xc] sm:$0xf] %v918
    %984 = vst [vmem:[%s979 + $0x10] sm:$0xf] %v919
    %985 = vst [vmem:[%s979 + $0x14] sm:$0xf] %v920
    %986 = vst [vmem:[%s979 + $0x18] sm:$0xf] %v921
    %987 = vst [vmem:[%s979 + $0x1c] sm:$0xf] %v922
    %988 = vst [vmem:[%s979 + $0x20] sm:$0xf] %v923
    %989 = vst [vmem:[%s979 + $0x24] sm:$0xf] %v924
    %990 = vst [vmem:[%s979 + $0x28] sm:$0xf] %v925
    %991 = vst [vmem:[%s979 + $0x2c] sm:$0xf] %v926
    %992 = vst [vmem:[%s979 + $0x30] sm:$0xf] %v927
    %993 = vst [vmem:[%s979 + $0x34] sm:$0xf] %v928
    %994 = vst [vmem:[%s979 + $0x38] sm:$0xf] %v929
    %995 = vst [vmem:[%s979 + $0x3c] sm:$0xf] %v930
    %996 = vst [vmem:[%s979 + $0x40] sm:$0xf] %v931
    %997 = vst [vmem:[%s979 + $0x44] sm:$0xf] %v932
    %998 = vst [vmem:[%s979 + $0x48] sm:$0xf] %v933
    %999 = vst [vmem:[%s979 + $0x4c] sm:$0xf] %v934
    %1000 = vst [vmem:[%s979 + $0x50] sm:$0xf] %v935
    %1001 = vst [vmem:[%s979 + $0x54] sm:$0xf] %v936
    %1002 = vst [vmem:[%s979 + $0x58] sm:$0xf] %v937
    %1003 = vst [vmem:[%s979 + $0x5c] sm:$0xf] %v938
    %1004 = vst [vmem:[%s979 + $0x60] sm:$0xf] %v939
    %1005 = vst [vmem:[%s979 + $0x64] sm:$0xf] %v940
    %1006 = vst [vmem:[%s979 + $0x68] sm:$0xf] %v941
    %1007 = vst [vmem:[%s979 + $0x6c] sm:$0xf] %v942
    %1008 = vst [vmem:[%s979 + $0x70] sm:$0xf] %v943
    %1009 = vst [vmem:[%s979 + $0x74] sm:$0xf] %v944
    %1010 = vst [vmem:[%s979 + $0x78] sm:$0xf] %v945
    %1011 = vst [vmem:[%s979 + $0x7c] sm:$0xf] %v946
    // Predicated region
    $region14: #{tpu_custom_call.1} parent=1 // pred_check
      _
    $region15: #{tpu_custom_call.1} parent=1 // pred_check_branch
      %1013 = sbr.rel (0) target = $region17
    $region16: #{tpu_custom_call.1} parent=1 // pred_region
      %s1015 = ssub.s32 4096, 4096
      %1016 = vsyncadd [#allocation3], %s1015
      %s1017 = sshll.u32 [#allocation2], 4
      %s1018 = int_to_ptr.vmem [resolvable:$true] %s1017
      %1023 = dma.vmem_to_hbm [thread:$0]  %s1018, 4096, %s3, [#allocation3], 64, 64, 4
    $region17: #{tpu_custom_call.1} parent=1 // pred_fallthru
      _
    // Predicated region
    $region18: #{tpu_custom_call.1} parent=1 // pred_check
      _
    $region19: #{tpu_custom_call.1} parent=1 // pred_check_branch
      %1025 = sbr.rel (0) target = $region21
    $region20: #{tpu_custom_call.1} parent=1 // pred_region
      %1026 = dma.done [#allocation3], 4096
    $region21: #{tpu_custom_call.1} parent=1 // pred_fallthru
      _
    %1027 = vsyncpa [#allocation3], 1

</llo_original>
